<compile_context>
chip_gen: v7x
topology: tpu7x:2x2x1
jax: 0.10.0
libtpu: 0.0.40
codegen_flags: <defaults>
</compile_context>

<pallas_src>
import jax
import jax.numpy as jnp
from jax.experimental import pallas as pl
from jax.experimental.pallas import tpu as pltpu

_LANE = 128


def _toynet_kernel(params_ref, x_ref, o_ref):
    # params_ref: (3,)     f32 in SMEM  -> (w0, w1, b)
    # x_ref:      (2, TB)  f32 in VMEM, lane-dense (batch on the 128-lane axis)
    # o_ref:      (1, TB)  f32 in VMEM, lane-dense
    w0 = params_ref[0]
    w1 = params_ref[1]
    b = params_ref[2]

    x0 = x_ref[0:1, :]              # (1, TB) static sublane select, full lanes
    x1 = x_ref[1:2, :]              # (1, TB)

    # VPU scalar-broadcast FMAs + bias add; lane-dense unmasked store.
    o_ref[...] = x0 * w0 + x1 * w1 + b


def toynet_forward(x, weight, bias, *, block_b=131072):
    """ToyNet.forward: y = x @ weight.T + bias.

    x: (B, 2) f32, weight: (1, 2) f32 (torch layout), bias: (1,) f32 -> (B, 1) f32.
    """
    B, IN = x.shape
    OUT, IN_w = weight.shape
    assert IN == 2 and IN_w == 2 and OUT == 1

    x = x.astype(jnp.float32)
    # Fold weight + bias into a single tiny 1-D SMEM params vector (w0, w1, b).
    params = jnp.concatenate(
        [weight.reshape(-1), bias.reshape(-1)]).astype(jnp.float32)   # (3,)

    # Lane-dense activation layout: batch on the lane axis.
    # TODO(synk): at large B, store activations as (IN, B) upstream so this
    # transpose does not cost an extra HBM pass.
    x_t = x.T                                                         # (2, B)

    # Pad the lane (batch) axis up to a multiple of 128 / the block size.
    if B <= block_b:
        bp = max(_LANE, ((B + _LANE - 1) // _LANE) * _LANE)
        tb = bp
    else:
        tb = block_b                                                  # multiple of 128
        bp = ((B + tb - 1) // tb) * tb
    if bp != B:
        x_t = jnp.pad(x_t, ((0, 0), (0, bp - B)))

    flops = 2 * B * IN * OUT + B * OUT          # FMAs + bias adds
    bytes_accessed = 4 * (B * IN + IN * OUT + OUT + B * OUT)
    cost = pl.CostEstimate(flops=flops, transcendentals=0,
                           bytes_accessed=bytes_accessed)

    if bp == tb:
        # Launch-bound tiny case: single-shot, no grid / pipeline overhead.
        # TODO(synk): at this size the op is 100% dispatch-bound; fuse the
        # surrounding ops (loss, next layer) into this call when they exist.
        y_t = pl.pallas_call(
            _toynet_kernel,
            out_shape=jax.ShapeDtypeStruct((OUT, bp), jnp.float32),
            in_specs=[
                pl.BlockSpec(memory_space=pltpu.MemorySpace.SMEM),    # params
                pl.BlockSpec(memory_space=pltpu.MemorySpace.VMEM),    # x (2, bp)
            ],
            out_specs=pl.BlockSpec(memory_space=pltpu.MemorySpace.VMEM),
            cost_estimate=cost,
        )(params, x_t)
    else:
        # HBM-bound at scale: 1-D parallel grid over the lane/batch axis
        # (sharded across v7x's 2 TensorCores), lane-aligned blocks.
        grid = (bp // tb,)
        y_t = pl.pallas_call(
            _toynet_kernel,
            out_shape=jax.ShapeDtypeStruct((OUT, bp), jnp.float32),
            grid=grid,
            in_specs=[
                pl.BlockSpec(memory_space=pltpu.MemorySpace.SMEM),    # params (whole)
                pl.BlockSpec((IN, tb), lambda i: (0, i)),             # x block
            ],
            out_specs=pl.BlockSpec((OUT, tb), lambda i: (0, i)),
            compiler_params=pltpu.CompilerParams(
                dimension_semantics=("parallel",)),
            cost_estimate=cost,
        )(params, x_t)

    # Back to torch layout (B, OUT) outside the kernel.
    return y_t[:, :B].T


if __name__ == "__main__":
    key = jax.random.PRNGKey(0)
    kx, kw, kb, kx2 = jax.random.split(key, 4)

    B, IN, OUT = 8, 2, 1  # nn.Linear(2, 1)

    # PyTorch-like uniform init in [-1/sqrt(IN), 1/sqrt(IN)], torch layouts.
    bound = 1.0 / jnp.sqrt(jnp.float32(IN))
    weight = jax.random.uniform(kw, (OUT, IN), jnp.float32, -bound, bound)  # (1, 2)
    bias = jax.random.uniform(kb, (OUT,), jnp.float32, -bound, bound)       # (1,)

    x = jax.random.normal(kx, (B, IN), jnp.float32)

    # Tiny launch-bound path (single-shot, no grid).
    y = jax.block_until_ready(toynet_forward(x, weight, bias))
    y_ref = x @ weight.T + bias
    assert y.shape == (B, OUT)
    assert jnp.allclose(y, y_ref, atol=1e-5, rtol=1e-5), "mismatch vs reference"

    # Exercise the gridded (scaled) path with a small forced block size,
    # including a ragged batch that needs lane padding.
    B2 = 500
    x2 = jax.random.normal(kx2, (B2, IN), jnp.float32)
    y2 = jax.block_until_ready(toynet_forward(x2, weight, bias, block_b=128))
    y2_ref = x2 @ weight.T + bias
    assert y2.shape == (B2, OUT)
    assert jnp.allclose(y2, y2_ref, atol=1e-5, rtol=1e-5), "mismatch vs reference (grid)"

    print("KERNEL_OK")
</pallas_src>

<mosaic_0001>
module attributes {stable_mosaic.version = 11 : i64} {
  func.func @_toynet_kernel(%arg0: memref<3xf32, #tpu.memory_space<smem>>, %arg1: memref<2x128xf32, #tpu.memory_space<vmem>>, %arg2: memref<1x128xf32, #tpu.memory_space<vmem>>) attributes {dimension_semantics = [], scalar_prefetch = 0 : i64, scratch_operands = 0 : i64, tpu.core_type = #tpu.core_type<tc>} {
    %c0 = arith.constant 0 : index
    %0 = memref.load %arg0[%c0] : memref<3xf32, #tpu.memory_space<smem>>
    %c1 = arith.constant 1 : index
    %1 = memref.load %arg0[%c1] : memref<3xf32, #tpu.memory_space<smem>>
    %c2 = arith.constant 2 : index
    %2 = memref.load %arg0[%c2] : memref<3xf32, #tpu.memory_space<smem>>
    %c0_0 = arith.constant 0 : index
    %c0_1 = arith.constant 0 : index
    %3 = vector.load %arg1[%c0_0, %c0_1] : memref<2x128xf32, #tpu.memory_space<vmem>>, vector<1x128xf32>
    %c1_2 = arith.constant 1 : index
    %c0_3 = arith.constant 0 : index
    %4 = vector.load %arg1[%c1_2, %c0_3] : memref<2x128xf32, #tpu.memory_space<vmem>>, vector<1x128xf32>
    %5 = vector.broadcast %0 : f32 to vector<1x128xf32>
    %6 = arith.mulf %3, %5 : vector<1x128xf32>
    %7 = vector.broadcast %1 : f32 to vector<1x128xf32>
    %8 = arith.mulf %4, %7 : vector<1x128xf32>
    %9 = arith.addf %6, %8 : vector<1x128xf32>
    %10 = vector.broadcast %2 : f32 to vector<1x128xf32>
    %11 = arith.addf %9, %10 : vector<1x128xf32>
    %c0_4 = arith.constant 0 : index
    %c0_5 = arith.constant 0 : index
    %12 = vector.load %arg2[%c0_4, %c0_5] : memref<1x128xf32, #tpu.memory_space<vmem>>, vector<1x128xf32>
    tpu.vector_store %arg2[%c0_4, %c0_5], %11 {strides = array<i32>} : memref<1x128xf32, #tpu.memory_space<vmem>>, vector<1x128xf32>,
    return
  }
}

</mosaic_0001>

<llo_original>
// kernel: tpu_custom_call.1
$region0: #{tpu_custom_call.1}
  #allocation0 [shape = 'u32[]', space=smem, size = 0x4, offset = 0x4, fixed_abs, tag = 'smem constant byte address 0x4 - core index']
  #allocation1 [shape = 'u32[144,128]{1,0:T(1,128)}', space=vmem, size = 0x12000, scoped, tag = 'internal scratch']
  %s0 = inlined_call_operand.hbm [shape: f32[3], index: 0, kind: input, shape index: {}]
  %s1 = inlined_call_operand.vmem [shape: f32[2,128], index: 1, kind: input, shape index: {}]
  %s2 = inlined_call_operand.hbm [shape: f32[1,128], index: 2, kind: output, shape index: {}]
  %s3 = sld [smem:[#allocation0]]
  $region22: #{tpu_custom_call.1} parent=0
    _
  %s5 = ssub.s32 1, %s3
  %s6 = scalar_select 0, %s5, %s3
  $region1: #{tpu_custom_call.1} parent=0
    #allocation2 [shape = 'u8[512]{0}', space=smem, size = 0x200, scoped, tag = 'input window, operand 0, single buffered']
    #allocation3 [shape = 's32[1]{0}', space=sflag, size = 0x4, scoped, tag = 'scoped memory for tpu_custom_call.1']
    #allocation4 [shape = 's32[1]{0}', space=sflag, size = 0x4, scoped, tag = 'scoped memory for tpu_custom_call.1']
    #allocation5 [shape = 'u8[512]{0}', space=vmem, size = 0x400, scoped, tag = 'output window, operand 0, single buffered']
    %7 = vsyncpa [#allocation4], 0
    %8 = vsyncpa [#allocation3], 0
    // Predicated region
    $region2: #{tpu_custom_call.1} parent=1 // pred_check
      _
    $region3: #{tpu_custom_call.1} parent=1 // pred_check_branch
      %10 = sbr.rel (0) target = $region5
    $region4: #{tpu_custom_call.1} parent=1 // pred_region
      %s12 = ssub.s32 16, 16
      %13 = vsyncadd [#allocation4], %s12
      %16 = dma.hbm_to_smem %s0, 16, [#allocation2], [#allocation4]
    $region5: #{tpu_custom_call.1} parent=1 // pred_fallthru
      _
    // Predicated region
    $region6: #{tpu_custom_call.1} parent=1 // pred_check
      _
    $region7: #{tpu_custom_call.1} parent=1 // pred_check_branch
      %18 = sbr.rel (0) target = $region9
    $region8: #{tpu_custom_call.1} parent=1 // pred_region
      _
    $region9: #{tpu_custom_call.1} parent=1 // pred_fallthru
      _
    // Predicated region
    $region10: #{tpu_custom_call.1} parent=1 // pred_check
      _
    $region11: #{tpu_custom_call.1} parent=1 // pred_check_branch
      %20 = sbr.rel (0) target = $region13
    $region12: #{tpu_custom_call.1} parent=1 // pred_region
      %21 = dma.done [#allocation4], 16
    $region13: #{tpu_custom_call.1} parent=1 // pred_fallthru
      _
    %22 = sfence
    %s23 = sld [smem:[#allocation2]]
    %s24 = sld [smem:[#allocation2 + $0x1]]
    %s25 = sld [smem:[#allocation2 + $0x2]]
    %v26 = vld [vmem:[%s1] sm:$0x1]
    %v27 = vld [vmem:[%s1 + $0x1] sm:$0x1]
    %v28 = vstv %s23
    %v29 = vmul.f32 %v26, %v28
    %v30 = vstv %s24
    %v31 = vmul.f32 %v27, %v30
    %v32 = vadd.f32 %v29, %v31
    %v33 = vstv %s25
    %v34 = vadd.f32 %v32, %v33
    %35 = vst [vmem:[#allocation5] sm:$0x1] %v34
    // Predicated region
    $region14: #{tpu_custom_call.1} parent=1 // pred_check
      _
    $region15: #{tpu_custom_call.1} parent=1 // pred_check_branch
      %37 = sbr.rel (0) target = $region17
    $region16: #{tpu_custom_call.1} parent=1 // pred_region
      %s39 = ssub.s32 16, 16
      %40 = vsyncadd [#allocation3], %s39
      %s42 = sshll.u32 [#allocation5], 4
      %s43 = int_to_ptr.vmem [resolvable:$true] %s42
      %45 = dma.vmem_to_hbm [thread:$0]  %s43, 16, %s2, [#allocation3]
    $region17: #{tpu_custom_call.1} parent=1 // pred_fallthru
      _
    // Predicated region
    $region18: #{tpu_custom_call.1} parent=1 // pred_check
      _
    $region19: #{tpu_custom_call.1} parent=1 // pred_check_branch
      %47 = sbr.rel (0) target = $region21
    $region20: #{tpu_custom_call.1} parent=1 // pred_region
      %48 = dma.done [#allocation3], 16
    $region21: #{tpu_custom_call.1} parent=1 // pred_fallthru
      _
    %49 = vsyncpa [#allocation3], 1
    %50 = vsyncpa [#allocation4], 1

</llo_original>
